<compile_context>
chip_gen: v7x
topology: tpu7x:2x2x1
jax: 0.10.0
libtpu: 0.0.40
codegen_flags: <defaults>
</compile_context>

<pallas_src>
import functools

import jax
import jax.numpy as jnp
from jax.experimental import pallas as pl
from jax.experimental.pallas import tpu as pltpu

_EPS = 1e-8            # matches torch.nn.CosineSimilarity default eps
_EPS2 = _EPS * _EPS    # applied to squared norms (sqrt is monotone)


def _round_up(x, m):
    return ((x + m - 1) // m) * m


def _triplet_kernel(a_ref, p_ref, n_ref, o_ref, *, margin, n_rows, block_rows):
    a = a_ref[...].astype(jnp.float32)
    p = p_ref[...].astype(jnp.float32)
    n = n_ref[...].astype(jnp.float32)

    dot_ap = jnp.sum(a * p, axis=-1, keepdims=True)            # (TB, 1)
    dot_an = jnp.sum(a * n, axis=-1, keepdims=True)            # (TB, 1)

    # Squared norms; eps^2 on the squared quantity preserves torch's
    # max(||x||, eps) semantics.  sq_a is hoisted and reused for both pairs.
    sq_a = jnp.maximum(jnp.sum(a * a, axis=-1, keepdims=True), _EPS2)
    sq_p = jnp.maximum(jnp.sum(p * p, axis=-1, keepdims=True), _EPS2)
    sq_n = jnp.maximum(jnp.sum(n * n, axis=-1, keepdims=True), _EPS2)

    cos_pos = dot_ap * jax.lax.rsqrt(sq_a * sq_p)
    cos_neg = dot_an * jax.lax.rsqrt(sq_a * sq_n)

    losses = jnp.maximum(margin - cos_pos + cos_neg, 0.0)      # relu, (TB, 1)

    # Ragged-tile masking only exists at trace time when B % TB != 0; the select
    # comes after the nonlinearity so padded-row garbage cannot leak into the sum.
    if n_rows % block_rows != 0:
        i = pl.program_id(0)
        row = i * block_rows + jax.lax.broadcasted_iota(jnp.int32, losses.shape, 0)
        losses = jnp.where(row < n_rows, losses, 0.0)

    # Per-block partial sum, broadcast into this block's private (1, 8, 128)
    # output tile (unmasked, layout-aligned store); summed in the wrapper.
    block_sum = jnp.sum(losses)
    o_ref[...] = jnp.full(o_ref.shape, block_sum, dtype=jnp.float32)


def triplet_head(anchor, positive, negative, *, margin, block_rows=1024):
    """Pallas implementation of TripletHead.forward (size_average=True)."""
    assert anchor.shape == positive.shape == negative.shape
    assert anchor.ndim == 2, "use (B, D) layout; flatten leading dims outside"
    B, D = anchor.shape
    if B == 0:
        return jnp.float32(jnp.nan)   # torch: mean of empty tensor is NaN

    dtype_bytes = jnp.dtype(anchor.dtype).itemsize
    granule = max(8, 32 // dtype_bytes)          # sublane granule: f32 8, bf16 16, int8 32

    # Generation-aware VMEM budget for the 3 inputs x 2 pipeline buffers.
    try:
        vmem_cap = int(pltpu.get_tpu_info().vmem_capacity_bytes)
    except Exception:
        vmem_cap = 64 << 20                      # conservative (v7x per-core VMEM)
    in_buffer_budget = min(max(vmem_cap // 2 - (8 << 20), 8 << 20), 48 << 20)

    tb_cap = max(granule, in_buffer_budget // (3 * 2 * D * dtype_bytes))
    b_pad = _round_up(B, granule)
    tb = min(block_rows, tb_cap, b_pad)
    tb = max(granule, (tb // granule) * granule)  # round to sublane granule

    grid = (pl.cdiv(B, tb),)
    num_blocks = grid[0]

    in_buf_bytes = 3 * 2 * tb * D * dtype_bytes
    vmem_limit = int(min(max(in_buf_bytes + (8 << 20), 32 << 20),
                         max(vmem_cap - (16 << 20), 32 << 20)))

    kernel = functools.partial(
        _triplet_kernel, margin=float(margin), n_rows=B, block_rows=tb)

    row_spec = pl.BlockSpec((tb, D), lambda i: (i, 0))

    partials = pl.pallas_call(
        kernel,
        out_shape=jax.ShapeDtypeStruct((num_blocks, 8, 128), jnp.float32),
        grid=grid,
        in_specs=[row_spec, row_spec, row_spec],
        out_specs=pl.BlockSpec((1, 8, 128), lambda i: (i, 0, 0)),
        compiler_params=pltpu.CompilerParams(
            dimension_semantics=("parallel",),   # both TCs stream on v7x
            vmem_limit_bytes=vmem_limit),
    )(anchor, positive, negative)

    # Sum the per-block partial sums and apply the mean (size_average=True).
    return jnp.sum(partials[:, 0, 0]) / jnp.float32(B)


def _reference(anchor, positive, negative, margin):
    # Pure-JAX reference mirroring the PyTorch forward.
    anchor = anchor.astype(jnp.float32)
    positive = positive.astype(jnp.float32)
    negative = negative.astype(jnp.float32)

    def cos(x, y):
        dot = jnp.sum(x * y, axis=-1)
        nx = jnp.maximum(jnp.linalg.norm(x, axis=-1), _EPS)
        ny = jnp.maximum(jnp.linalg.norm(y, axis=-1), _EPS)
        return dot / (nx * ny)

    losses = jax.nn.relu(margin - cos(anchor, positive) + cos(anchor, negative))
    return jnp.mean(losses)


if __name__ == "__main__":
    margin = 0.2  # deterministic "constructor" argument
    B, D = 20, 128

    key = jax.random.PRNGKey(0)
    ka, kp, kn = jax.random.split(key, 3)
    anchor = jax.random.normal(ka, (B, D), dtype=jnp.float32)
    positive = jax.random.normal(kp, (B, D), dtype=jnp.float32)
    negative = jax.random.normal(kn, (B, D), dtype=jnp.float32)
    ref = _reference(anchor, positive, negative, margin)

    # 1) f32, forced small tile -> multi-block parallel grid with a ragged last tile.
    loss = triplet_head(anchor, positive, negative, margin=margin, block_rows=8)
    loss = jax.block_until_ready(loss)
    assert jnp.allclose(loss, ref, atol=1e-5, rtol=1e-5), (loss, ref)

    # 2) f32, default (auto-sized) tile -> single ragged block.
    loss_auto = triplet_head(anchor, positive, negative, margin=margin)
    loss_auto = jax.block_until_ready(loss_auto)
    assert jnp.allclose(loss_auto, ref, atol=1e-5, rtol=1e-5), (loss_auto, ref)

    # 3) bf16 inputs (half the HBM traffic); tile rounds to the 16-row bf16 granule.
    a16, p16, n16 = (x.astype(jnp.bfloat16) for x in (anchor, positive, negative))
    loss16 = triplet_head(a16, p16, n16, margin=margin, block_rows=8)
    loss16 = jax.block_until_ready(loss16)
    ref16 = _reference(a16, p16, n16, margin)
    assert jnp.allclose(loss16, ref16, atol=1e-5, rtol=1e-5), (loss16, ref16)

    print("KERNEL_OK")
</pallas_src>

<mosaic_0001>
module attributes {stable_mosaic.version = 11 : i64} {
  func.func @_triplet_kernel(%arg0: i32, %arg1: memref<8x128xf32, #tpu.memory_space<vmem>>, %arg2: memref<8x128xf32, #tpu.memory_space<vmem>>, %arg3: memref<8x128xf32, #tpu.memory_space<vmem>>, %arg4: memref<1x8x128xf32, #tpu.memory_space<vmem>>) attributes {dimension_semantics = [#tpu.dimension_semantics<parallel>], iteration_bounds = array<i64: 3>, scalar_prefetch = 0 : i64, scratch_operands = 0 : i64, tpu.core_type = #tpu.core_type<tc>, window_params = [{transform_indices = @transform_0, window_bounds = array<i64: 8, 128>}, {transform_indices = @transform_1, window_bounds = array<i64: 8, 128>}, {transform_indices = @transform_2, window_bounds = array<i64: 8, 128>}, {transform_indices = @transform_3, window_bounds = array<i64: 1, 8, 128>}]} {
    %c0 = arith.constant 0 : index
    %c0_0 = arith.constant 0 : index
    %0 = vector.load %arg1[%c0, %c0_0] : memref<8x128xf32, #tpu.memory_space<vmem>>, vector<8x128xf32>
    %c0_1 = arith.constant 0 : index
    %c0_2 = arith.constant 0 : index
    %1 = vector.load %arg2[%c0_1, %c0_2] : memref<8x128xf32, #tpu.memory_space<vmem>>, vector<8x128xf32>
    %c0_3 = arith.constant 0 : index
    %c0_4 = arith.constant 0 : index
    %2 = vector.load %arg3[%c0_3, %c0_4] : memref<8x128xf32, #tpu.memory_space<vmem>>, vector<8x128xf32>
    %3 = arith.mulf %0, %1 : vector<8x128xf32>
    %cst = arith.constant dense<0.000000e+00> : vector<8xf32>
    %4 = vector.multi_reduction <add>, %3, %cst [1] : vector<8x128xf32> to vector<8xf32>
    %5 = vector.shape_cast %4 : vector<8xf32> to vector<8x1xf32>
    %6 = arith.mulf %0, %2 : vector<8x128xf32>
    %cst_5 = arith.constant dense<0.000000e+00> : vector<8xf32>
    %7 = vector.multi_reduction <add>, %6, %cst_5 [1] : vector<8x128xf32> to vector<8xf32>
    %8 = vector.shape_cast %7 : vector<8xf32> to vector<8x1xf32>
    %9 = arith.mulf %0, %0 : vector<8x128xf32>
    %cst_6 = arith.constant dense<0.000000e+00> : vector<8xf32>
    %10 = vector.multi_reduction <add>, %9, %cst_6 [1] : vector<8x128xf32> to vector<8xf32>
    %11 = vector.shape_cast %10 : vector<8xf32> to vector<8x1xf32>
    %cst_7 = arith.constant 1.000000e-16 : f32
    %12 = vector.broadcast %cst_7 : f32 to vector<8x1xf32>
    %13 = arith.maximumf %11, %12 : vector<8x1xf32>
    %14 = arith.mulf %1, %1 : vector<8x128xf32>
    %cst_8 = arith.constant dense<0.000000e+00> : vector<8xf32>
    %15 = vector.multi_reduction <add>, %14, %cst_8 [1] : vector<8x128xf32> to vector<8xf32>
    %16 = vector.shape_cast %15 : vector<8xf32> to vector<8x1xf32>
    %cst_9 = arith.constant 1.000000e-16 : f32
    %17 = vector.broadcast %cst_9 : f32 to vector<8x1xf32>
    %18 = arith.maximumf %16, %17 : vector<8x1xf32>
    %19 = arith.mulf %2, %2 : vector<8x128xf32>
    %cst_10 = arith.constant dense<0.000000e+00> : vector<8xf32>
    %20 = vector.multi_reduction <add>, %19, %cst_10 [1] : vector<8x128xf32> to vector<8xf32>
    %21 = vector.shape_cast %20 : vector<8xf32> to vector<8x1xf32>
    %cst_11 = arith.constant 1.000000e-16 : f32
    %22 = vector.broadcast %cst_11 : f32 to vector<8x1xf32>
    %23 = arith.maximumf %21, %22 : vector<8x1xf32>
    %24 = arith.mulf %13, %18 : vector<8x1xf32>
    %25 = math.rsqrt %24 : vector<8x1xf32>
    %26 = arith.mulf %5, %25 : vector<8x1xf32>
    %27 = arith.mulf %13, %23 : vector<8x1xf32>
    %28 = math.rsqrt %27 : vector<8x1xf32>
    %29 = arith.mulf %8, %28 : vector<8x1xf32>
    %cst_12 = arith.constant 2.000000e-01 : f32
    %30 = vector.broadcast %cst_12 : f32 to vector<8x1xf32>
    %31 = arith.subf %30, %26 : vector<8x1xf32>
    %32 = arith.addf %31, %29 : vector<8x1xf32>
    %cst_13 = arith.constant 0.000000e+00 : f32
    %33 = vector.broadcast %cst_13 : f32 to vector<8x1xf32>
    %34 = arith.maximumf %32, %33 : vector<8x1xf32>
    %c8_i32 = arith.constant 8 : i32
    %35 = arith.muli %arg0, %c8_i32 : i32
    %36 = tpu.iota {dimensions = array<i32: 0>} : vector<8x1xi32>
    %37 = vector.broadcast %35 : i32 to vector<8x1xi32>
    %38 = arith.addi %37, %36 : vector<8x1xi32>
    %c20_i32 = arith.constant 20 : i32
    %39 = vector.broadcast %c20_i32 : i32 to vector<8x1xi32>
    %40 = arith.cmpi slt, %38, %39 : vector<8x1xi32>
    %cst_14 = arith.constant 0.000000e+00 : f32
    %41 = vector.broadcast %cst_14 : f32 to vector<8x1xf32>
    %42 = arith.select %40, %34, %41 : vector<8x1xi1>, vector<8x1xf32>
    %43 = vector.shape_cast %42 : vector<8x1xf32> to vector<1x8x1xf32>
    %cst_15 = arith.constant dense<0.000000e+00> : vector<1xf32>
    %44 = vector.multi_reduction <add>, %43, %cst_15 [1, 2] : vector<1x8x1xf32> to vector<1xf32>
    %45 = vector.shape_cast %44 : vector<1xf32> to vector<1x1x1xf32>
    %46 = vector.extract %45[0, 0, 0] : f32 from vector<1x1x1xf32>
    %47 = vector.broadcast %46 : f32 to vector<1x8x128xf32>
    %c0_16 = arith.constant 0 : index
    %c0_17 = arith.constant 0 : index
    %c0_18 = arith.constant 0 : index
    %48 = vector.load %arg4[%c0_16, %c0_17, %c0_18] : memref<1x8x128xf32, #tpu.memory_space<vmem>>, vector<1x8x128xf32>
    tpu.vector_store %arg4[%c0_16, %c0_17, %c0_18], %47 {strides = array<i32>} : memref<1x8x128xf32, #tpu.memory_space<vmem>>, vector<1x8x128xf32>,
    return
  }
  func.func @transform_0(%arg0: i32) -> (i32, i32) {
    %c0_i32 = arith.constant 0 : i32
    %c0_i32_0 = arith.constant 0 : i32
    return %arg0, %c0_i32 : i32, i32
  }
  func.func @transform_1(%arg0: i32) -> (i32, i32) {
    %c0_i32 = arith.constant 0 : i32
    %c0_i32_0 = arith.constant 0 : i32
    return %arg0, %c0_i32 : i32, i32
  }
  func.func @transform_2(%arg0: i32) -> (i32, i32) {
    %c0_i32 = arith.constant 0 : i32
    %c0_i32_0 = arith.constant 0 : i32
    return %arg0, %c0_i32 : i32, i32
  }
  func.func @transform_3(%arg0: i32) -> (i32, i32, i32) {
    %c0_i32 = arith.constant 0 : i32
    %c0_i32_0 = arith.constant 0 : i32
    %c0_i32_1 = arith.constant 0 : i32
    return %arg0, %c0_i32, %c0_i32_0 : i32, i32, i32
  }
}

</mosaic_0001>

<llo_original>
// kernel: tpu_custom_call.1
$region0: #{tpu_custom_call.1}
  #allocation0 [shape = 'u32[]', space=smem, size = 0x4, offset = 0x4, fixed_abs, tag = 'smem constant byte address 0x4 - core index']
  #allocation1 [shape = 'u32[144,128]{1,0:T(1,128)}', space=vmem, size = 0x12000, scoped, tag = 'internal scratch']
  %s0 = inlined_call_operand.hbm [shape: f32[20,128], index: 0, kind: input, shape index: {}]
  %s1 = inlined_call_operand.hbm [shape: f32[20,128], index: 1, kind: input, shape index: {}]
  %s2 = inlined_call_operand.hbm [shape: f32[20,128], index: 2, kind: input, shape index: {}]
  %s3 = inlined_call_operand.hbm [shape: f32[3,8,128], index: 3, kind: output, shape index: {}]
  %s4 = sld [smem:[#allocation0]]
  $region57: #{tpu_custom_call.1} parent=0
    _
  %s6 = ssub.s32 1, %s4
  %s7 = scalar_select 0, %s6, %s4
  $region1: #{tpu_custom_call.1} parent=0
    #allocation2 [shape = 'u8[8192]{0}', space=vmem, size = 0x2000, scoped, tag = 'input window, operand 0']
    #allocation3 [shape = 's32[2]{0}', space=sflag, size = 0x8, scoped, tag = 'scoped memory for tpu_custom_call.1']
    #allocation4 [shape = 's32[2]{0}', space=sflag, size = 0x8, scoped, tag = 'scoped memory for tpu_custom_call.1']
    #allocation5 [shape = 'u8[8192]{0}', space=vmem, size = 0x2000, scoped, tag = 'input window, operand 1']
    #allocation6 [shape = 's32[2]{0}', space=sflag, size = 0x8, scoped, tag = 'scoped memory for tpu_custom_call.1']
    #allocation7 [shape = 'u8[8192]{0}', space=vmem, size = 0x2000, scoped, tag = 'input window, operand 2']
    #allocation8 [shape = 'u8[8192]{0}', space=vmem, size = 0x2000, scoped, tag = 'output window, operand 0']
    %8 = vsyncpa [#allocation3], 0
    %s9 = scalar_lea.sflag [#allocation3], 1
    %10 = vsyncpa %s9, 0
    %11 = vsyncpa [#allocation6], 0
    %s12 = scalar_lea.sflag [#allocation6], 1
    %13 = vsyncpa %s12, 0
    %14 = vsyncpa [#allocation4], 0
    %s15 = scalar_lea.sflag [#allocation4], 1
    %16 = vsyncpa %s15, 0
    loop: start=0, step=1, limit=5
    $region2: #{tpu_custom_call.1} parent=1 // loop_pre_header
      _
    $region3: #{tpu_custom_call.1} parent=1 // loop_header
      %s18 = sphi 0, %s22
      %p19 = scmp.ge.s32.totalorder %s18, 5
      %s28 = sphi 0, %s30
      %s31 = sphi 0, %s28
      %s32 = sphi 0, %s31
      %s48 = sphi 0, %s32
      %s54 = sphi 0, %s56
      %s57 = sphi 0, %s54
      %s58 = sphi 0, %s57
      %s74 = sphi 0, %s58
      %s80 = sphi 0, %s82
      %s83 = sphi 0, %s80
      %s84 = sphi 0, %s83
      %s100 = sphi 0, %s84
      %s106 = sphi 0, %s108
      %s109 = sphi 0, %s106
      %s110 = sphi 0, %s109
      %s126 = sphi 0, %s110
    $region4: #{tpu_custom_call.1} parent=1 // loop_header_branch
      %21 = sbr.rel (%p19) target = $region8
    $region5: #{tpu_custom_call.1} parent=1 // loop_body
      %s23 = ssub.s32 %s18, 1
      %s24 = ssub.s32 %s18, 2
      %s25 = sadd.s32 %s18, 1
      %s26 = ssub.s32 %s18, %s25
      %p27 = scmp.eq.s32.totalorder %s26, 0
      %s29 = sadd.s32 %s28, 1
      %s30 = scalar_select %p27, %s28, %s29
      %p33 = pneg %p27
      %p34 = scmp.eq.s32.totalorder %s18, 2
      %p35 = por %p33, %p34
      %p36 = scmp.ne.s32.totalorder %s28, %s31
      %p37 = scmp.eq.s32.totalorder %s18, 0
      %p38 = por %p36, %p37
      %p39 = scmp.ne.s32.totalorder %s28, %s31
      %p40 = scmp.eq.s32.totalorder %s23, 2
      %p41 = por %p39, %p40
      %p42 = scmp.ne.s32.totalorder %s31, %s32
      %p43 = scmp.eq.s32.totalorder %s23, 0
      %p44 = por %p42, %p43
      %p45 = scmp.ne.s32.totalorder %s31, %s32
      %p46 = scmp.eq.s32.totalorder %s24, 2
      %p47 = por %p45, %p46
      %p49 = scmp.ne.s32.totalorder %s32, %s48
      %p50 = scmp.eq.s32.totalorder %s24, 0
      %p51 = por %p49, %p50
      %s52 = ssub.s32 %s18, %s25
      %p53 = scmp.eq.s32.totalorder %s52, 0
      %s55 = sadd.s32 %s54, 1
      %s56 = scalar_select %p53, %s54, %s55
      %p59 = pneg %p53
      %p60 = scmp.eq.s32.totalorder %s18, 2
      %p61 = por %p59, %p60
      %p62 = scmp.ne.s32.totalorder %s54, %s57
      %p63 = scmp.eq.s32.totalorder %s18, 0
      %p64 = por %p62, %p63
      %p65 = scmp.ne.s32.totalorder %s54, %s57
      %p66 = scmp.eq.s32.totalorder %s23, 2
      %p67 = por %p65, %p66
      %p68 = scmp.ne.s32.totalorder %s57, %s58
      %p69 = scmp.eq.s32.totalorder %s23, 0
      %p70 = por %p68, %p69
      %p71 = scmp.ne.s32.totalorder %s57, %s58
      %p72 = scmp.eq.s32.totalorder %s24, 2
      %p73 = por %p71, %p72
      %p75 = scmp.ne.s32.totalorder %s58, %s74
      %p76 = scmp.eq.s32.totalorder %s24, 0
      %p77 = por %p75, %p76
      %s78 = ssub.s32 %s18, %s25
      %p79 = scmp.eq.s32.totalorder %s78, 0
      %s81 = sadd.s32 %s80, 1
      %s82 = scalar_select %p79, %s80, %s81
      %p85 = pneg %p79
      %p86 = scmp.eq.s32.totalorder %s18, 2
      %p87 = por %p85, %p86
      %p88 = scmp.ne.s32.totalorder %s80, %s83
      %p89 = scmp.eq.s32.totalorder %s18, 0
      %p90 = por %p88, %p89
      %p91 = scmp.ne.s32.totalorder %s80, %s83
      %p92 = scmp.eq.s32.totalorder %s23, 2
      %p93 = por %p91, %p92
      %p94 = scmp.ne.s32.totalorder %s83, %s84
      %p95 = scmp.eq.s32.totalorder %s23, 0
      %p96 = por %p94, %p95
      %p97 = scmp.ne.s32.totalorder %s83, %s84
      %p98 = scmp.eq.s32.totalorder %s24, 2
      %p99 = por %p97, %p98
      %p101 = scmp.ne.s32.totalorder %s84, %s100
      %p102 = scmp.eq.s32.totalorder %s24, 0
      %p103 = por %p101, %p102
      %s104 = ssub.s32 %s18, %s25
      %p105 = scmp.eq.s32.totalorder %s104, 0
      %s107 = sadd.s32 %s106, 1
      %s108 = scalar_select %p105, %s106, %s107
      %p111 = pneg %p105
      %p112 = scmp.eq.s32.totalorder %s18, 2
      %p113 = por %p111, %p112
      %p114 = scmp.ne.s32.totalorder %s106, %s109
      %p115 = scmp.eq.s32.totalorder %s18, 0
      %p116 = por %p114, %p115
      %p117 = scmp.ne.s32.totalorder %s106, %s109
      %p118 = scmp.eq.s32.totalorder %s23, 2
      %p119 = por %p117, %p118
      %p120 = scmp.ne.s32.totalorder %s109, %s110
      %p121 = scmp.eq.s32.totalorder %s23, 0
      %p122 = por %p120, %p121
      %p123 = scmp.ne.s32.totalorder %s109, %s110
      %p124 = scmp.eq.s32.totalorder %s24, 2
      %p125 = por %p123, %p124
      %p127 = scmp.ne.s32.totalorder %s110, %s126
      %p128 = scmp.eq.s32.totalorder %s24, 0
      %p129 = por %p127, %p128
      %p130 = scmp.le.s32.totalorder 1, %s18
      %p131 = scmp.lt.s32.totalorder %s18, 4
      %p132 = pnand %p130, %p131
      %p133 = pneg %p132
      // Predicated region
      $region9: #{tpu_custom_call.1} parent=5 // pred_check
        _
      $region10: #{tpu_custom_call.1} parent=5 // pred_check_branch
        %135 = sbr.rel (%p132) target = $region12
      $region11: #{tpu_custom_call.1} parent=5 // pred_region
        %s136 = ssub.s32 %s18, 1
      $region12: #{tpu_custom_call.1} parent=5 // pred_fallthru
        _
      %p137 = scmp.lt.s32.totalorder %s18, 3
      // Predicated region
      $region13: #{tpu_custom_call.1} parent=5 // pred_check
        %p138 = pneg %p137
      $region14: #{tpu_custom_call.1} parent=5 // pred_check_branch
        %140 = sbr.rel (%p138) target = $region16
      $region15: #{tpu_custom_call.1} parent=5 // pred_region
        // Predicated region
        $region17: #{tpu_custom_call.1} parent=15 // pred_check
          %p141 = pneg %p38
        $region18: #{tpu_custom_call.1} parent=15 // pred_check_branch
          %143 = sbr.rel (%p141) target = $region20
        $region19: #{tpu_custom_call.1} parent=15 // pred_region
          %s144 = sand.u32 %s28, 1
          %s145 = scalar_lea.sflag [#allocation3], %s144
          %s146 = sand.u32 %s28, 1
          %s147 = smul.addr %s146, 8
          %s148 = scalar_lea.vmem [#allocation2], %s147
          %s150 = ssub.s32 128, 128
          %151 = vsyncadd %s145, %s150
          %s152 = smul.addr %s18, 128
          %s153 = scalar_lea.hbm %s0, %s152
          %s155 = sshll.u32 %s148, 4
          %s156 = int_to_ptr.vmem [resolvable:$true] %s155
          %158 = dma.hbm_to_vmem [thread:$0]  %s153, 128, %s156, %s145
        $region20: #{tpu_custom_call.1} parent=15 // pred_fallthru
          _
        // Predicated region
        $region21: #{tpu_custom_call.1} parent=15 // pred_check
          %p159 = pneg %p64
        $region22: #{tpu_custom_call.1} parent=15 // pred_check_branch
          %161 = sbr.rel (%p159) target = $region24
        $region23: #{tpu_custom_call.1} parent=15 // pred_region
          %s162 = sand.u32 %s18, 1
          %s163 = scalar_lea.sflag [#allocation6], %s162
          %s164 = sand.u32 %s54, 1
          %s165 = smul.addr %s164, 8
          %s166 = scalar_lea.vmem [#allocation5], %s165
          %s168 = ssub.s32 128, 128
          %169 = vsyncadd %s163, %s168
          %s170 = smul.addr %s18, 128
          %s171 = scalar_lea.hbm %s1, %s170
          %s173 = sshll.u32 %s166, 4
          %s174 = int_to_ptr.vmem [resolvable:$true] %s173
          %176 = dma.hbm_to_vmem [thread:$0]  %s171, 128, %s174, %s163
        $region24: #{tpu_custom_call.1} parent=15 // pred_fallthru
          _
        // Predicated region
        $region25: #{tpu_custom_call.1} parent=15 // pred_check
          %p177 = pneg %p90
        $region26: #{tpu_custom_call.1} parent=15 // pred_check_branch
          %179 = sbr.rel (%p177) target = $region28
        $region27: #{tpu_custom_call.1} parent=15 // pred_region
          %s180 = sand.u32 %s18, 1
          %s181 = scalar_lea.sflag [#allocation6], %s180
          %s182 = sand.u32 %s80, 1
          %s183 = smul.addr %s182, 8
          %s184 = scalar_lea.vmem [#allocation7], %s183
          %s186 = ssub.s32 128, 128
          %187 = vsyncadd %s181, %s186
          %s188 = smul.addr %s18, 128
          %s189 = scalar_lea.hbm %s2, %s188
          %s191 = sshll.u32 %s184, 4
          %s192 = int_to_ptr.vmem [resolvable:$true] %s191
          %194 = dma.hbm_to_vmem [thread:$0]  %s189, 128, %s192, %s181
        $region28: #{tpu_custom_call.1} parent=15 // pred_fallthru
          _
      $region16: #{tpu_custom_call.1} parent=5 // pred_fallthru
        _
      %p195 = scmp.le.s32.totalorder 1, %s18
      %p196 = scmp.lt.s32.totalorder %s18, 4
      %p197 = pnand %p195, %p196
      %p198 = pneg %p197
      // Predicated region
      $region29: #{tpu_custom_call.1} parent=5 // pred_check
        _
      $region30: #{tpu_custom_call.1} parent=5 // pred_check_branch
        %200 = sbr.rel (%p197) target = $region32
      $region31: #{tpu_custom_call.1} parent=5 // pred_region
        %s201 = ssub.s32 %s18, 1
        %s202 = sand.u32 %s31, 1
        %s203 = scalar_lea.sflag [#allocation3], %s202
        %s204 = sand.u32 %s31, 1
        %s205 = smul.addr %s204, 8
        %s206 = scalar_lea.vmem [#allocation2], %s205
        // Predicated region
        $region33: #{tpu_custom_call.1} parent=31 // pred_check
          %p207 = pneg %p44
        $region34: #{tpu_custom_call.1} parent=31 // pred_check_branch
          %209 = sbr.rel (%p207) target = $region36
        $region35: #{tpu_custom_call.1} parent=31 // pred_region
          %210 = dma.done %s203, 128
        $region36: #{tpu_custom_call.1} parent=31 // pred_fallthru
          _
        %s211 = sand.u32 %s23, 1
        %s212 = scalar_lea.sflag [#allocation6], %s211
        %s213 = sand.u32 %s57, 1
        %s214 = smul.addr %s213, 8
        %s215 = scalar_lea.vmem [#allocation5], %s214
        // Predicated region
        $region37: #{tpu_custom_call.1} parent=31 // pred_check
          %p216 = pneg %p70
        $region38: #{tpu_custom_call.1} parent=31 // pred_check_branch
          %218 = sbr.rel (%p216) target = $region40
        $region39: #{tpu_custom_call.1} parent=31 // pred_region
          %219 = dma.done %s212, 128
        $region40: #{tpu_custom_call.1} parent=31 // pred_fallthru
          _
        %s220 = sand.u32 %s23, 1
        %s221 = scalar_lea.sflag [#allocation6], %s220
        %s222 = sand.u32 %s83, 1
        %s223 = smul.addr %s222, 8
        %s224 = scalar_lea.vmem [#allocation7], %s223
        // Predicated region
        $region41: #{tpu_custom_call.1} parent=31 // pred_check
          %p225 = pneg %p96
        $region42: #{tpu_custom_call.1} parent=31 // pred_check_branch
          %227 = sbr.rel (%p225) target = $region44
        $region43: #{tpu_custom_call.1} parent=31 // pred_region
          %228 = dma.done %s221, 128
        $region44: #{tpu_custom_call.1} parent=31 // pred_fallthru
          _
        %s229 = sand.u32 %s31, 1
        %s230 = scalar_lea.sflag [#allocation3], %s229
        %s231 = sand.u32 %s31, 1
        %s232 = smul.addr %s231, 8
        %s233 = scalar_lea.vmem [#allocation2], %s232
        %p234 = pneg %p44
        %p235 = pneg %p41
        %s236 = sand.u32 %s23, 1
        %s237 = scalar_lea.sflag [#allocation6], %s236
        %s238 = sand.u32 %s57, 1
        %s239 = smul.addr %s238, 8
        %s240 = scalar_lea.vmem [#allocation5], %s239
        %p241 = pneg %p70
        %p242 = pneg %p67
        %s243 = sand.u32 %s23, 1
        %s244 = scalar_lea.sflag [#allocation6], %s243
        %s245 = sand.u32 %s83, 1
        %s246 = smul.addr %s245, 8
        %s247 = scalar_lea.vmem [#allocation7], %s246
        %p248 = pneg %p96
        %p249 = pneg %p93
        %p250 = pneg %p122
        %p251 = pneg %p119
        %s252 = sand.u32 %s109, 1
        %s253 = scalar_lea.sflag [#allocation4], %s252
        %s254 = sand.u32 %s109, 1
        %s255 = smul.addr %s254, 8
        %s256 = scalar_lea.vmem [#allocation8], %s255
        %v257 = vld [vmem:[%s206] sm:$0xff]
        %v258 = vld [vmem:[%s215] sm:$0xff]
        %v259 = vld [vmem:[%s224] sm:$0xff]
        %v260 = vmul.f32 %v257, %v258
        %261 = vadd.xlane.f32.xlu0 %v260
        %v262 = vpop.xlane.xlu0 %261
        %v263 = vmul.f32 %v257, %v259
        %264 = vadd.xlane.f32.xlu0 %v263
        %v265 = vpop.xlane.xlu0 %264
        %v266 = vmul.f32 %v257, %v257
        %267 = vadd.xlane.f32.xlu0 %v266
        %v268 = vpop.xlane.xlu0 %267
        %v269 = vmax.f32 %v268, 1e-16
        %v270 = vmul.f32 %v258, %v258
        %271 = vadd.xlane.f32.xlu0 %v270
        %v272 = vpop.xlane.xlu0 %271
        %v273 = vmax.f32 %v272, 1e-16
        %v274 = vmul.f32 %v259, %v259
        %275 = vadd.xlane.f32.xlu0 %v274
        %v276 = vpop.xlane.xlu0 %275
        %v277 = vmax.f32 %v276, 1e-16
        %v278 = vmul.f32 %v269, %v273
        %v279 = vrsqrt.pop %v278
        %v280 = vmul.f32 %v262, %v279
        %v281 = vmul.f32 %v269, %v277
        %v282 = vrsqrt.pop %v281
        %v283 = vmul.f32 %v265, %v282
        %v284 = vsub.f32 0.2, %v280
        %v285 = vadd.f32 %v284, %v283
        %v286 = vmax.f32 %v285, 0.0
        %s287 = smul.u32 %s23, 8
        %v288 = vlaneseq
        %v289 = vshrl.u32 %v288, 7
        %v290 = vstv %s287
        %v291 = vadd.s32 %v290, %v289
        %vm292 = vcmp.lt.s32.totalorder %v291, 20
        %v293 = vsel %vm292, %v286, 0.0
        %vm294 = vcmask 7168
        %v295 = vsel %vm294, %v293, 0.0
        %296 = vadd.xlane.f32.xlu0 %v295
        %v297 = vpop.xlane.xlu0 %296
        %v298 = vrot.slane %v297, 4
        %v299 = vadd.f32 %v297, %v298
        %v300 = vrot.slane %v299, 2
        %v301 = vadd.f32 %v299, %v300
        %v302 = vrot.slane %v301, 1
        %v303 = vadd.f32 %v301, %v302
        %s304 = vtos %v303
        %v305 = vstv %s304
        %306 = vst [vmem:[%s256] sm:$0xff] %v305
        %s307 = sand.u32 %s109, 1
        %s308 = scalar_lea.sflag [#allocation4], %s307
        %s309 = sand.u32 %s109, 1
        %s310 = smul.addr %s309, 8
        %s311 = scalar_lea.vmem [#allocation8], %s310
        // Predicated region
        $region45: #{tpu_custom_call.1} parent=31 // pred_check
          %p312 = pneg %p119
        $region46: #{tpu_custom_call.1} parent=31 // pred_check_branch
          %314 = sbr.rel (%p312) target = $region48
        $region47: #{tpu_custom_call.1} parent=31 // pred_region
          %s316 = ssub.s32 128, 128
          %317 = vsyncadd %s308, %s316
          %s318 = smul.addr %s23, 128
          %s319 = scalar_lea.hbm %s3, %s318
          %s321 = sshll.u32 %s311, 4
          %s322 = int_to_ptr.vmem [resolvable:$true] %s321
          %324 = dma.vmem_to_hbm [thread:$0]  %s322, 128, %s319, %s308
        $region48: #{tpu_custom_call.1} parent=31 // pred_fallthru
          _
      $region32: #{tpu_custom_call.1} parent=5 // pred_fallthru
        _
      %p325 = scmp.le.s32.totalorder 2, %s18
      // Predicated region
      $region49: #{tpu_custom_call.1} parent=5 // pred_check
        %p326 = pneg %p325
      $region50: #{tpu_custom_call.1} parent=5 // pred_check_branch
        %328 = sbr.rel (%p326) target = $region52
      $region51: #{tpu_custom_call.1} parent=5 // pred_region
        %s329 = ssub.s32 %s18, 2
        // Predicated region
        $region53: #{tpu_custom_call.1} parent=51 // pred_check
          %p330 = pneg %p125
        $region54: #{tpu_custom_call.1} parent=51 // pred_check_branch
          %332 = sbr.rel (%p330) target = $region56
        $region55: #{tpu_custom_call.1} parent=51 // pred_region
          %s333 = sand.u32 %s110, 1
          %s334 = scalar_lea.sflag [#allocation4], %s333
          %s335 = sand.u32 %s110, 1
          %s336 = smul.addr %s335, 8
          %s337 = scalar_lea.vmem [#allocation8], %s336
          %338 = dma.done %s334, 128
        $region56: #{tpu_custom_call.1} parent=51 // pred_fallthru
          _
      $region52: #{tpu_custom_call.1} parent=5 // pred_fallthru
        _
    $region6: #{tpu_custom_call.1} parent=1 // loop_footer
      %s22 = sadd.s32 1, %s18
    $region7: #{tpu_custom_call.1} parent=1 // loop_footer_branch
      %17 = sbr.rel target = $region3
    $region8: #{tpu_custom_call.1} parent=1 // loop_exit
      _
    %339 = vsyncpa [#allocation3], 1
    %s340 = scalar_lea.sflag [#allocation3], 1
    %341 = vsyncpa %s340, 1
    %342 = vsyncpa [#allocation6], 1
    %s343 = scalar_lea.sflag [#allocation6], 1
    %344 = vsyncpa %s343, 1
    %345 = vsyncpa [#allocation4], 1
    %s346 = scalar_lea.sflag [#allocation4], 1
    %347 = vsyncpa %s346, 1

</llo_original>
